<compile_context>
chip_gen: v7x
topology: tpu7x:2x2x1
jax: 0.10.0
libtpu: 0.0.40
codegen_flags: <defaults>
</compile_context>

<pallas_src>
import jax
import jax.numpy as jnp
from jax.experimental import pallas as pl
from jax.experimental.pallas import tpu as pltpu


def _round_up(x, m):
    return (x + m - 1) // m * m


def _lstm_kernel(x_ref, wih_ref, whh_ref, b_ref, o_ref, h_ref, c_ref):
    """One timestep for one batch tile.

    x_ref  : (TB, Kp)       current timestep's input tile
    wih_ref: (Kp, 4*Hp)     packed input->gates weights (VMEM resident)
    whh_ref: (Hp, 4*Hp)     packed hidden->gates weights (VMEM resident)
    b_ref  : (1, 4*Hp)      packed combined bias (VMEM resident)
    o_ref  : (TB, Hp)       this timestep's output tile
    h_ref, c_ref : (TB, Hp) f32 scratch carrying the recurrent state.
    """
    t = pl.program_id(1)
    hp = h_ref.shape[-1]

    @pl.when(t == 0)
    def _():
        h_ref[...] = jnp.zeros_like(h_ref)
        c_ref[...] = jnp.zeros_like(c_ref)

    # Gate pre-activations: two MXU matmuls, f32 accumulation, one bias add.
    gates = (
        jnp.dot(x_ref[...], wih_ref[...], preferred_element_type=jnp.float32)
        + jnp.dot(h_ref[...], whh_ref[...], preferred_element_type=jnp.float32)
        + b_ref[...]
    )

    # PyTorch gate order: input, forget, cell(g), output.
    # Slices are lane-aligned because Hp is a multiple of 128.
    i = jax.nn.sigmoid(gates[:, 0 * hp:1 * hp])
    f = jax.nn.sigmoid(gates[:, 1 * hp:2 * hp])
    g = jnp.tanh(gates[:, 2 * hp:3 * hp])
    o = jax.nn.sigmoid(gates[:, 3 * hp:4 * hp])

    c = f * c_ref[...] + i * g
    h = o * jnp.tanh(c)

    c_ref[...] = c
    h_ref[...] = h
    o_ref[...] = h.astype(o_ref.dtype)


def pack_lstm_params(w_ih, w_hh, b_ih, b_hh, *, k_pad, h_pad, dtype):
    """One-time weight packing (in real use, do this once outside the hot loop).

    Returns:
      wih_t: (k_pad, 4*h_pad)  padded W_ih^T, gate-blocked along lanes
      whh_t: (h_pad, 4*h_pad)  padded W_hh^T, gate-blocked along lanes
      bias : (1, 4*h_pad)      padded (b_ih + b_hh)
    """
    four_h, n_in = w_ih.shape
    h = four_h // 4
    wih_t = jnp.zeros((k_pad, 4 * h_pad), dtype)
    whh_t = jnp.zeros((h_pad, 4 * h_pad), dtype)
    bias = jnp.zeros((1, 4 * h_pad), jnp.float32)
    for g in range(4):
        wih_t = wih_t.at[:n_in, g * h_pad:g * h_pad + h].set(
            w_ih[g * h:(g + 1) * h, :].T.astype(dtype))
        whh_t = whh_t.at[:h, g * h_pad:g * h_pad + h].set(
            w_hh[g * h:(g + 1) * h, :].T.astype(dtype))
        bias = bias.at[0, g * h_pad:g * h_pad + h].set(
            (b_ih[g * h:(g + 1) * h] + b_hh[g * h:(g + 1) * h]).astype(jnp.float32))
    return wih_t, whh_t, bias


def simple_lstm(x, w_ih, w_hh, b_ih, b_hh, *, tile_b=256):
    """x: (T, B, nIn); PyTorch-layout LSTM params -> (T, B, nHidden)."""
    T, B, n_in = x.shape
    H = w_hh.shape[1]

    # Lane/sublane-friendly padded sizes.
    tb = min(_round_up(B, 8), tile_b)     # batch tile (multiple of 8 sublanes)
    Bp = _round_up(B, tb)
    Kp = _round_up(n_in, 128)             # lane-dense x / MXU contraction
    Hp = _round_up(H, 128)                # lane-dense gates & output

    compute_dtype = x.dtype               # switch to bf16 on v6e/v7x if allowed

    wih_t, whh_t, bias = pack_lstm_params(
        w_ih, w_hh, b_ih, b_hh, k_pad=Kp, h_pad=Hp, dtype=compute_dtype)

    xp = jnp.zeros((T, Bp, Kp), compute_dtype).at[:, :B, :n_in].set(
        x.astype(compute_dtype))

    out = pl.pallas_call(
        _lstm_kernel,
        out_shape=jax.ShapeDtypeStruct((T, Bp, Hp), x.dtype),
        grid=(Bp // tb, T),
        in_specs=[
            # x[t], batch tile b — pipelined (prefetch t+1 during compute of t)
            pl.BlockSpec((None, tb, Kp), lambda b, t: (t, b, 0)),
            pl.BlockSpec((Kp, 4 * Hp), lambda b, t: (0, 0)),   # resident W_ih^T
            pl.BlockSpec((Hp, 4 * Hp), lambda b, t: (0, 0)),   # resident W_hh^T
            pl.BlockSpec((1, 4 * Hp), lambda b, t: (0, 0)),    # resident bias
        ],
        out_specs=pl.BlockSpec((None, tb, Hp), lambda b, t: (t, b, 0)),
        scratch_shapes=[
            pltpu.VMEM((tb, Hp), jnp.float32),   # h carry
            pltpu.VMEM((tb, Hp), jnp.float32),   # c carry
        ],
        compiler_params=pltpu.CompilerParams(
            # batch tiles independent -> parallel (2-TC on v7x);
            # time carries the recurrence -> arbitrary (sequential).
            dimension_semantics=("parallel", "arbitrary"),
        ),
    )(xp, wih_t, whh_t, bias)

    return out[:, :B, :H]


def lstm_reference(x, w_ih, w_hh, b_ih, b_hh):
    """Plain-JAX reference matching torch.nn.LSTM (zero initial state)."""
    B = x.shape[1]
    H = w_hh.shape[1]

    def step(carry, x_t):
        h, c = carry
        gates = x_t @ w_ih.T + b_ih + h @ w_hh.T + b_hh
        i, f, g, o = jnp.split(gates, 4, axis=-1)
        i = jax.nn.sigmoid(i)
        f = jax.nn.sigmoid(f)
        g = jnp.tanh(g)
        o = jax.nn.sigmoid(o)
        c = f * c + i * g
        h = o * jnp.tanh(c)
        return (h, c), h

    init = (jnp.zeros((B, H), jnp.float32), jnp.zeros((B, H), jnp.float32))
    _, ys = jax.lax.scan(step, init, x)
    return ys


if __name__ == "__main__":
    # Shapes implied by the module's forward: input is (timesteps, batch, nIn).
    T, B, nIn, nHidden = 8, 2, 32, 32

    key = jax.random.PRNGKey(0)
    kx, k1, k2, k3, k4 = jax.random.split(key, 5)

    # Deterministic init matching nn.LSTM's uniform(-1/sqrt(H), 1/sqrt(H)).
    bound = 1.0 / (nHidden ** 0.5)
    w_ih = jax.random.uniform(k1, (4 * nHidden, nIn), jnp.float32, -bound, bound)
    w_hh = jax.random.uniform(k2, (4 * nHidden, nHidden), jnp.float32, -bound, bound)
    b_ih = jax.random.uniform(k3, (4 * nHidden,), jnp.float32, -bound, bound)
    b_hh = jax.random.uniform(k4, (4 * nHidden,), jnp.float32, -bound, bound)
    x = jax.random.normal(kx, (T, B, nIn), jnp.float32)

    y = simple_lstm(x, w_ih, w_hh, b_ih, b_hh)
    y = jax.block_until_ready(y)

    y_ref = lstm_reference(x, w_ih, w_hh, b_ih, b_hh)
    assert y.shape == (T, B, nHidden), y.shape
    assert jnp.allclose(y, y_ref, atol=1e-4, rtol=1e-4), float(
        jnp.max(jnp.abs(y - y_ref)))

    print("KERNEL_OK")
</pallas_src>

<mosaic_0001>
module attributes {stable_mosaic.version = 11 : i64} {
  func.func @_lstm_kernel(%arg0: i32, %arg1: i32, %arg2: memref<1x8x128xf32, #tpu.memory_space<vmem>>, %arg3: memref<128x512xf32, #tpu.memory_space<vmem>>, %arg4: memref<128x512xf32, #tpu.memory_space<vmem>>, %arg5: memref<1x512xf32, #tpu.memory_space<vmem>>, %arg6: memref<1x8x128xf32, #tpu.memory_space<vmem>>, %arg7: memref<8x128xf32, #tpu.memory_space<vmem>>, %arg8: memref<8x128xf32, #tpu.memory_space<vmem>>) attributes {dimension_semantics = [#tpu.dimension_semantics<parallel>, #tpu.dimension_semantics<arbitrary>], iteration_bounds = array<i64: 1, 8>, scalar_prefetch = 0 : i64, scratch_operands = 2 : i64, tpu.core_type = #tpu.core_type<tc>, window_params = [{transform_indices = @transform_0, window_bounds = array<i64: 1, 8, 128>}, {pipeline_mode = #tpu.pipeline_mode<synchronous>, transform_indices = @transform_1, window_bounds = array<i64: 128, 512>}, {pipeline_mode = #tpu.pipeline_mode<synchronous>, transform_indices = @transform_2, window_bounds = array<i64: 128, 512>}, {pipeline_mode = #tpu.pipeline_mode<synchronous>, transform_indices = @transform_3, window_bounds = array<i64: 1, 512>}, {transform_indices = @transform_4, window_bounds = array<i64: 1, 8, 128>}]} {
    %c0_i32 = arith.constant 0 : i32
    %0 = arith.cmpi eq, %arg1, %c0_i32 : i32
    %1 = arith.extui %0 : i1 to i32
    %c0_i32_0 = arith.constant 0 : i32
    %2 = arith.cmpi ne, %1, %c0_i32_0 : i32
    scf.if %2 {
      %cst_24 = arith.constant 0.000000e+00 : f32
      %45 = vector.broadcast %cst_24 : f32 to vector<8x128xf32>
      %c0_25 = arith.constant 0 : index
      %c0_26 = arith.constant 0 : index
      %46 = vector.load %arg7[%c0_25, %c0_26] : memref<8x128xf32, #tpu.memory_space<vmem>>, vector<8x128xf32>
      tpu.vector_store %arg7[%c0_25, %c0_26], %45 {strides = array<i32>} : memref<8x128xf32, #tpu.memory_space<vmem>>, vector<8x128xf32>,
      %cst_27 = arith.constant 0.000000e+00 : f32
      %47 = vector.broadcast %cst_27 : f32 to vector<8x128xf32>
      %c0_28 = arith.constant 0 : index
      %c0_29 = arith.constant 0 : index
      %48 = vector.load %arg8[%c0_28, %c0_29] : memref<8x128xf32, #tpu.memory_space<vmem>>, vector<8x128xf32>
      tpu.vector_store %arg8[%c0_28, %c0_29], %47 {strides = array<i32>} : memref<8x128xf32, #tpu.memory_space<vmem>>, vector<8x128xf32>,
    } else {
    }
    %c0 = arith.constant 0 : index
    %c0_1 = arith.constant 0 : index
    %c0_2 = arith.constant 0 : index
    %3 = vector.load %arg2[%c0, %c0_1, %c0_2] : memref<1x8x128xf32, #tpu.memory_space<vmem>>, vector<1x8x128xf32>
    %4 = vector.shape_cast %3 : vector<1x8x128xf32> to vector<8x128xf32>
    %c0_3 = arith.constant 0 : index
    %c0_4 = arith.constant 0 : index
    %5 = vector.load %arg3[%c0_3, %c0_4] : memref<128x512xf32, #tpu.memory_space<vmem>>, vector<128x512xf32>
    %cst = arith.constant dense<0.000000e+00> : vector<8x512xf32>
    %6 = tpu.matmul %4, %5, %cst {dimension_numbers = #tpu.dot_dimension_numbers<[1], [0], [0], [1], [0, 0, 1, 1], [], []>} : vector<8x128xf32>, vector<128x512xf32>, vector<8x512xf32> -> vector<8x512xf32>
    %c0_5 = arith.constant 0 : index
    %c0_6 = arith.constant 0 : index
    %7 = vector.load %arg7[%c0_5, %c0_6] : memref<8x128xf32, #tpu.memory_space<vmem>>, vector<8x128xf32>
    %c0_7 = arith.constant 0 : index
    %c0_8 = arith.constant 0 : index
    %8 = vector.load %arg4[%c0_7, %c0_8] : memref<128x512xf32, #tpu.memory_space<vmem>>, vector<128x512xf32>
    %cst_9 = arith.constant dense<0.000000e+00> : vector<8x512xf32>
    %9 = tpu.matmul %7, %8, %cst_9 {dimension_numbers = #tpu.dot_dimension_numbers<[1], [0], [0], [1], [0, 0, 1, 1], [], []>} : vector<8x128xf32>, vector<128x512xf32>, vector<8x512xf32> -> vector<8x512xf32>
    %10 = arith.addf %6, %9 : vector<8x512xf32>
    %c0_10 = arith.constant 0 : index
    %c0_11 = arith.constant 0 : index
    %11 = vector.load %arg5[%c0_10, %c0_11] : memref<1x512xf32, #tpu.memory_space<vmem>>, vector<1x512xf32>
    %12 = vector.broadcast %11 : vector<1x512xf32> to vector<8x512xf32>
    %13 = arith.addf %10, %12 : vector<8x512xf32>
    %14 = vector.extract_strided_slice %13 {offsets = [0, 0], sizes = [8, 128], strides = [1, 1]} : vector<8x512xf32> to vector<8x128xf32>
    %15 = arith.negf %14 : vector<8x128xf32>
    %16 = math.exp %15 : vector<8x128xf32>
    %cst_12 = arith.constant 1.000000e+00 : f32
    %17 = vector.broadcast %cst_12 : f32 to vector<8x128xf32>
    %18 = arith.addf %17, %16 : vector<8x128xf32>
    %19 = arith.divf %17, %18 : vector<8x128xf32>
    %20 = vector.extract_strided_slice %13 {offsets = [0, 128], sizes = [8, 128], strides = [1, 1]} : vector<8x512xf32> to vector<8x128xf32>
    %21 = arith.negf %20 : vector<8x128xf32>
    %22 = math.exp %21 : vector<8x128xf32>
    %cst_13 = arith.constant 1.000000e+00 : f32
    %23 = vector.broadcast %cst_13 : f32 to vector<8x128xf32>
    %24 = arith.addf %23, %22 : vector<8x128xf32>
    %25 = arith.divf %23, %24 : vector<8x128xf32>
    %26 = vector.extract_strided_slice %13 {offsets = [0, 256], sizes = [8, 128], strides = [1, 1]} : vector<8x512xf32> to vector<8x128xf32>
    %27 = math.tanh %26 : vector<8x128xf32>
    %28 = vector.extract_strided_slice %13 {offsets = [0, 384], sizes = [8, 128], strides = [1, 1]} : vector<8x512xf32> to vector<8x128xf32>
    %29 = arith.negf %28 : vector<8x128xf32>
    %30 = math.exp %29 : vector<8x128xf32>
    %cst_14 = arith.constant 1.000000e+00 : f32
    %31 = vector.broadcast %cst_14 : f32 to vector<8x128xf32>
    %32 = arith.addf %31, %30 : vector<8x128xf32>
    %33 = arith.divf %31, %32 : vector<8x128xf32>
    %c0_15 = arith.constant 0 : index
    %c0_16 = arith.constant 0 : index
    %34 = vector.load %arg8[%c0_15, %c0_16] : memref<8x128xf32, #tpu.memory_space<vmem>>, vector<8x128xf32>
    %35 = arith.mulf %25, %34 : vector<8x128xf32>
    %36 = arith.mulf %19, %27 : vector<8x128xf32>
    %37 = arith.addf %35, %36 : vector<8x128xf32>
    %38 = math.tanh %37 : vector<8x128xf32>
    %39 = arith.mulf %33, %38 : vector<8x128xf32>
    %c0_17 = arith.constant 0 : index
    %c0_18 = arith.constant 0 : index
    %40 = vector.load %arg8[%c0_17, %c0_18] : memref<8x128xf32, #tpu.memory_space<vmem>>, vector<8x128xf32>
    tpu.vector_store %arg8[%c0_17, %c0_18], %37 {strides = array<i32>} : memref<8x128xf32, #tpu.memory_space<vmem>>, vector<8x128xf32>,
    %c0_19 = arith.constant 0 : index
    %c0_20 = arith.constant 0 : index
    %41 = vector.load %arg7[%c0_19, %c0_20] : memref<8x128xf32, #tpu.memory_space<vmem>>, vector<8x128xf32>
    tpu.vector_store %arg7[%c0_19, %c0_20], %39 {strides = array<i32>} : memref<8x128xf32, #tpu.memory_space<vmem>>, vector<8x128xf32>,
    %c0_21 = arith.constant 0 : index
    %c0_22 = arith.constant 0 : index
    %c0_23 = arith.constant 0 : index
    %42 = vector.load %arg6[%c0_21, %c0_22, %c0_23] : memref<1x8x128xf32, #tpu.memory_space<vmem>>, vector<1x8x128xf32>
    %43 = vector.shape_cast %42 : vector<1x8x128xf32> to vector<8x128xf32>
    %44 = vector.shape_cast %39 : vector<8x128xf32> to vector<1x8x128xf32>
    tpu.vector_store %arg6[%c0_21, %c0_22, %c0_23], %44 {strides = array<i32>} : memref<1x8x128xf32, #tpu.memory_space<vmem>>, vector<1x8x128xf32>,
    return
  }
  func.func @transform_0(%arg0: i32, %arg1: i32) -> (i32, i32, i32) {
    %c0_i32 = arith.constant 0 : i32
    %c0_i32_0 = arith.constant 0 : i32
    return %arg1, %arg0, %c0_i32 : i32, i32, i32
  }
  func.func @transform_1(%arg0: i32, %arg1: i32) -> (i32, i32) {
    %c0_i32 = arith.constant 0 : i32
    %c0_i32_0 = arith.constant 0 : i32
    %c0_i32_1 = arith.constant 0 : i32
    return %c0_i32, %c0_i32_0 : i32, i32
  }
  func.func @transform_2(%arg0: i32, %arg1: i32) -> (i32, i32) {
    %c0_i32 = arith.constant 0 : i32
    %c0_i32_0 = arith.constant 0 : i32
    %c0_i32_1 = arith.constant 0 : i32
    return %c0_i32, %c0_i32_0 : i32, i32
  }
  func.func @transform_3(%arg0: i32, %arg1: i32) -> (i32, i32) {
    %c0_i32 = arith.constant 0 : i32
    %c0_i32_0 = arith.constant 0 : i32
    %c0_i32_1 = arith.constant 0 : i32
    return %c0_i32, %c0_i32_0 : i32, i32
  }
  func.func @transform_4(%arg0: i32, %arg1: i32) -> (i32, i32, i32) {
    %c0_i32 = arith.constant 0 : i32
    %c0_i32_0 = arith.constant 0 : i32
    return %arg1, %arg0, %c0_i32 : i32, i32, i32
  }
}

</mosaic_0001>

<llo_original>
// kernel: tpu_custom_call.1
$region0: #{tpu_custom_call.1}
  #allocation0 [shape = 'u32[]', space=smem, size = 0x4, offset = 0x4, fixed_abs, tag = 'smem constant byte address 0x4 - core index']
  #allocation1 [shape = 'u32[144,128]{1,0:T(1,128)}', space=vmem, size = 0x12000, scoped, tag = 'internal scratch']
  #allocation2 [shape = 'f32[8,128]{1,0:T(8,128)}', space=vmem, size = 0x1000, scoped, tag = 'scratch operand']
  #allocation3 [shape = 'f32[8,128]{1,0:T(8,128)}', space=vmem, size = 0x1000, scoped, tag = 'scratch operand']
  %s0 = inlined_call_operand.hbm [shape: f32[8,8,128], index: 0, kind: input, shape index: {}]
  %s1 = inlined_call_operand.hbm [shape: f32[128,512], index: 1, kind: input, shape index: {}]
  %s2 = inlined_call_operand.hbm [shape: f32[128,512], index: 2, kind: input, shape index: {}]
  %s3 = inlined_call_operand.vmem [shape: f32[1,512], index: 3, kind: input, shape index: {}]
  %s4 = inlined_call_operand.hbm [shape: f32[8,8,128], index: 4, kind: output, shape index: {}]
  %s5 = sld [smem:[#allocation0]]
  $region65: #{tpu_custom_call.1} parent=0
    _
  %s7 = ssub.s32 1, %s5
  %s8 = scalar_select 0, %s7, %s5
  $region1: #{tpu_custom_call.1} parent=0
    #allocation4 [shape = 'u8[8192]{0}', space=vmem, size = 0x2000, scoped, tag = 'input window, operand 0']
    #allocation5 [shape = 's32[2]{0}', space=sflag, size = 0x8, scoped, tag = 'scoped memory for tpu_custom_call.1']
    #allocation6 [shape = 's32[2]{0}', space=sflag, size = 0x8, scoped, tag = 'scoped memory for tpu_custom_call.1']
    #allocation7 [shape = 'u8[262144]{0}', space=vmem, size = 0x40000, scoped, tag = 'input window, operand 1, single buffered']
    #allocation8 [shape = 's32[1]{0}', space=sflag, size = 0x4, scoped, tag = 'scoped memory for tpu_custom_call.1']
    #allocation9 [shape = 'u8[262144]{0}', space=vmem, size = 0x40000, scoped, tag = 'input window, operand 2, single buffered']
    #allocation10 [shape = 'u8[8192]{0}', space=vmem, size = 0x2000, scoped, tag = 'output window, operand 0']
    %9 = vsyncpa [#allocation5], 0
    %s10 = scalar_lea.sflag [#allocation5], 1
    %11 = vsyncpa %s10, 0
    %12 = vsyncpa [#allocation8], 0
    %13 = vsyncpa [#allocation6], 0
    %s14 = scalar_lea.sflag [#allocation6], 1
    %15 = vsyncpa %s14, 0
    loop: start=0, step=1, limit=10
    $region2: #{tpu_custom_call.1} parent=1 // loop_pre_header
      _
    $region3: #{tpu_custom_call.1} parent=1 // loop_header
      %s17 = sphi 0, %s21
      %p18 = scmp.ge.s32.totalorder %s17, 10
      %s24 = sphi 0, %s36
      %s25 = sphi 0, %s32
      %s26 = sphi 0, %s24
      %s27 = sphi 0, %s25
      %s28 = sphi 0, %s26
      %s29 = sphi 0, %s27
      %s41 = sphi 0, %s43
      %s44 = sphi 0, %s41
      %s45 = sphi 0, %s44
      %s61 = sphi 0, %s45
      %s65 = sphi 0, %s65
      %s67 = sphi 0, %s65
      %s68 = sphi 0, %s67
      %s82 = sphi 0, %s68
      %s86 = sphi 0, %s86
      %s88 = sphi 0, %s86
      %s89 = sphi 0, %s88
      %s103 = sphi 0, %s89
      %s107 = sphi 0, %s107
      %s109 = sphi 0, %s107
      %s110 = sphi 0, %s109
      %s124 = sphi 0, %s110
      %s132 = sphi 0, %s134
      %s135 = sphi 0, %s132
      %s136 = sphi 0, %s135
      %s152 = sphi 0, %s136
    $region4: #{tpu_custom_call.1} parent=1 // loop_header_branch
      %20 = sbr.rel (%p18) target = $region8
    $region5: #{tpu_custom_call.1} parent=1 // loop_body
      %s22 = ssub.s32 %s17, 1
      %s23 = ssub.s32 %s17, 2
      %s30 = sadd.s32 1, %s25
      %p31 = scmp.ge.s32.totalorder %s30, 8
      %s32 = scalar_select %p31, 0, %s30
      %s33 = sadd.s32 1, %s24
      %s34 = scalar_select %p31, %s33, %s24
      %p35 = scmp.ge.s32.totalorder %s34, 1
      %s36 = scalar_select %p35, 0, %s34
      %s37 = ssub.s32 %s25, %s32
      %s38 = ssub.s32 %s24, %s36
      %s39 = sor.u32 %s37, %s38
      %p40 = scmp.eq.s32.totalorder %s39, 0
      %s42 = sadd.s32 %s41, 1
      %s43 = scalar_select %p40, %s41, %s42
      %p46 = pneg %p40
      %p47 = scmp.eq.s32.totalorder %s17, 7
      %p48 = por %p46, %p47
      %p49 = scmp.ne.s32.totalorder %s41, %s44
      %p50 = scmp.eq.s32.totalorder %s17, 0
      %p51 = por %p49, %p50
      %p52 = scmp.ne.s32.totalorder %s41, %s44
      %p53 = scmp.eq.s32.totalorder %s22, 7
      %p54 = por %p52, %p53
      %p55 = scmp.ne.s32.totalorder %s44, %s45
      %p56 = scmp.eq.s32.totalorder %s22, 0
      %p57 = por %p55, %p56
      %p58 = scmp.ne.s32.totalorder %s44, %s45
      %p59 = scmp.eq.s32.totalorder %s23, 7
      %p60 = por %p58, %p59
      %p62 = scmp.ne.s32.totalorder %s45, %s61
      %p63 = scmp.eq.s32.totalorder %s23, 0
      %p64 = por %p62, %p63
      %s66 = sadd.s32 %s65, 1
      %p69 = scmp.eq.s32.totalorder %s17, 7
      %p70 = scmp.ne.s32.totalorder %s65, %s67
      %p71 = scmp.eq.s32.totalorder %s17, 0
      %p72 = por %p70, %p71
      %p73 = scmp.ne.s32.totalorder %s65, %s67
      %p74 = scmp.eq.s32.totalorder %s22, 7
      %p75 = por %p73, %p74
      %p76 = scmp.ne.s32.totalorder %s67, %s68
      %p77 = scmp.eq.s32.totalorder %s22, 0
      %p78 = por %p76, %p77
      %p79 = scmp.ne.s32.totalorder %s67, %s68
      %p80 = scmp.eq.s32.totalorder %s23, 7
      %p81 = por %p79, %p80
      %p83 = scmp.ne.s32.totalorder %s68, %s82
      %p84 = scmp.eq.s32.totalorder %s23, 0
      %p85 = por %p83, %p84
      %s87 = sadd.s32 %s86, 1
      %p90 = scmp.eq.s32.totalorder %s17, 7
      %p91 = scmp.ne.s32.totalorder %s86, %s88
      %p92 = scmp.eq.s32.totalorder %s17, 0
      %p93 = por %p91, %p92
      %p94 = scmp.ne.s32.totalorder %s86, %s88
      %p95 = scmp.eq.s32.totalorder %s22, 7
      %p96 = por %p94, %p95
      %p97 = scmp.ne.s32.totalorder %s88, %s89
      %p98 = scmp.eq.s32.totalorder %s22, 0
      %p99 = por %p97, %p98
      %p100 = scmp.ne.s32.totalorder %s88, %s89
      %p101 = scmp.eq.s32.totalorder %s23, 7
      %p102 = por %p100, %p101
      %p104 = scmp.ne.s32.totalorder %s89, %s103
      %p105 = scmp.eq.s32.totalorder %s23, 0
      %p106 = por %p104, %p105
      %s108 = sadd.s32 %s107, 1
      %p111 = scmp.eq.s32.totalorder %s17, 7
      %p112 = scmp.ne.s32.totalorder %s107, %s109
      %p113 = scmp.eq.s32.totalorder %s17, 0
      %p114 = por %p112, %p113
      %p115 = scmp.ne.s32.totalorder %s107, %s109
      %p116 = scmp.eq.s32.totalorder %s22, 7
      %p117 = por %p115, %p116
      %p118 = scmp.ne.s32.totalorder %s109, %s110
      %p119 = scmp.eq.s32.totalorder %s22, 0
      %p120 = por %p118, %p119
      %p121 = scmp.ne.s32.totalorder %s109, %s110
      %p122 = scmp.eq.s32.totalorder %s23, 7
      %p123 = por %p121, %p122
      %p125 = scmp.ne.s32.totalorder %s110, %s124
      %p126 = scmp.eq.s32.totalorder %s23, 0
      %p127 = por %p125, %p126
      %s128 = ssub.s32 %s25, %s32
      %s129 = ssub.s32 %s24, %s36
      %s130 = sor.u32 %s128, %s129
      %p131 = scmp.eq.s32.totalorder %s130, 0
      %s133 = sadd.s32 %s132, 1
      %s134 = scalar_select %p131, %s132, %s133
      %p137 = pneg %p131
      %p138 = scmp.eq.s32.totalorder %s17, 7
      %p139 = por %p137, %p138
      %p140 = scmp.ne.s32.totalorder %s132, %s135
      %p141 = scmp.eq.s32.totalorder %s17, 0
      %p142 = por %p140, %p141
      %p143 = scmp.ne.s32.totalorder %s132, %s135
      %p144 = scmp.eq.s32.totalorder %s22, 7
      %p145 = por %p143, %p144
      %p146 = scmp.ne.s32.totalorder %s135, %s136
      %p147 = scmp.eq.s32.totalorder %s22, 0
      %p148 = por %p146, %p147
      %p149 = scmp.ne.s32.totalorder %s135, %s136
      %p150 = scmp.eq.s32.totalorder %s23, 7
      %p151 = por %p149, %p150
      %p153 = scmp.ne.s32.totalorder %s136, %s152
      %p154 = scmp.eq.s32.totalorder %s23, 0
      %p155 = por %p153, %p154
      %p156 = scmp.le.s32.totalorder 1, %s17
      %p157 = scmp.lt.s32.totalorder %s17, 9
      %p158 = pnand %p156, %p157
      %p159 = pneg %p158
      // Predicated region
      $region9: #{tpu_custom_call.1} parent=5 // pred_check
        _
      $region10: #{tpu_custom_call.1} parent=5 // pred_check_branch
        %161 = sbr.rel (%p158) target = $region12
      $region11: #{tpu_custom_call.1} parent=5 // pred_region
        %s162 = ssub.s32 %s17, 1
        // Predicated region
        $region13: #{tpu_custom_call.1} parent=11 // pred_check
          %p163 = pneg %p78
        $region14: #{tpu_custom_call.1} parent=11 // pred_check_branch
          %165 = sbr.rel (%p163) target = $region16
        $region15: #{tpu_custom_call.1} parent=11 // pred_region
          %s167 = ssub.s32 8192, 8192
          %168 = vsyncadd [#allocation8], %s167
          %s169 = sshll.u32 [#allocation7], 4
          %s170 = int_to_ptr.vmem [resolvable:$true] %s169
          %175 = dma.hbm_to_vmem [thread:$0]  %s1, 8192, %s170, [#allocation8], 512, 512, 32
        $region16: #{tpu_custom_call.1} parent=11 // pred_fallthru
          _
        // Predicated region
        $region17: #{tpu_custom_call.1} parent=11 // pred_check
          %p176 = pneg %p99
        $region18: #{tpu_custom_call.1} parent=11 // pred_check_branch
          %178 = sbr.rel (%p176) target = $region20
        $region19: #{tpu_custom_call.1} parent=11 // pred_region
          %s180 = ssub.s32 8192, 8192
          %181 = vsyncadd [#allocation8], %s180
          %s182 = sshll.u32 [#allocation9], 4
          %s183 = int_to_ptr.vmem [resolvable:$true] %s182
          %188 = dma.hbm_to_vmem [thread:$0]  %s2, 8192, %s183, [#allocation8], 512, 512, 32
        $region20: #{tpu_custom_call.1} parent=11 // pred_fallthru
          _
        // Predicated region
        $region21: #{tpu_custom_call.1} parent=11 // pred_check
          %p189 = pneg %p120
        $region22: #{tpu_custom_call.1} parent=11 // pred_check_branch
          %191 = sbr.rel (%p189) target = $region24
        $region23: #{tpu_custom_call.1} parent=11 // pred_region
          _
        $region24: #{tpu_custom_call.1} parent=11 // pred_fallthru
          _
      $region12: #{tpu_custom_call.1} parent=5 // pred_fallthru
        _
      %p192 = scmp.lt.s32.totalorder %s17, 8
      // Predicated region
      $region25: #{tpu_custom_call.1} parent=5 // pred_check
        %p193 = pneg %p192
      $region26: #{tpu_custom_call.1} parent=5 // pred_check_branch
        %195 = sbr.rel (%p193) target = $region28
      $region27: #{tpu_custom_call.1} parent=5 // pred_region
        // Predicated region
        $region29: #{tpu_custom_call.1} parent=27 // pred_check
          %p196 = pneg %p51
        $region30: #{tpu_custom_call.1} parent=27 // pred_check_branch
          %198 = sbr.rel (%p196) target = $region32
        $region31: #{tpu_custom_call.1} parent=27 // pred_region
          %s199 = sand.u32 %s41, 1
          %s200 = scalar_lea.sflag [#allocation5], %s199
          %s201 = sand.u32 %s41, 1
          %s202 = smul.addr %s201, 8
          %s203 = scalar_lea.vmem [#allocation4], %s202
          %s205 = ssub.s32 128, 128
          %206 = vsyncadd %s200, %s205
          %s207 = sadd.s32 %s24, %s25
          %s208 = smul.addr %s207, 128
          %s209 = scalar_lea.hbm %s0, %s208
          %s211 = sshll.u32 %s203, 4
          %s212 = int_to_ptr.vmem [resolvable:$true] %s211
          %214 = dma.hbm_to_vmem [thread:$0]  %s209, 128, %s212, %s200
        $region32: #{tpu_custom_call.1} parent=27 // pred_fallthru
          _
      $region28: #{tpu_custom_call.1} parent=5 // pred_fallthru
        _
      %p215 = scmp.le.s32.totalorder 1, %s17
      %p216 = scmp.lt.s32.totalorder %s17, 9
      %p217 = pnand %p215, %p216
      %p218 = pneg %p217
      // Predicated region
      $region33: #{tpu_custom_call.1} parent=5 // pred_check
        _
      $region34: #{tpu_custom_call.1} parent=5 // pred_check_branch
        %220 = sbr.rel (%p217) target = $region36
      $region35: #{tpu_custom_call.1} parent=5 // pred_region
        %s221 = ssub.s32 %s17, 1
        %s222 = sand.u32 %s44, 1
        %s223 = scalar_lea.sflag [#allocation5], %s222
        %s224 = sand.u32 %s44, 1
        %s225 = smul.addr %s224, 8
        %s226 = scalar_lea.vmem [#allocation4], %s225
        // Predicated region
        $region37: #{tpu_custom_call.1} parent=35 // pred_check
          %p227 = pneg %p57
        $region38: #{tpu_custom_call.1} parent=35 // pred_check_branch
          %229 = sbr.rel (%p227) target = $region40
        $region39: #{tpu_custom_call.1} parent=35 // pred_region
          %230 = dma.done %s223, 128
        $region40: #{tpu_custom_call.1} parent=35 // pred_fallthru
          _
        // Predicated region
        $region41: #{tpu_custom_call.1} parent=35 // pred_check
          %p231 = pneg %p78
        $region42: #{tpu_custom_call.1} parent=35 // pred_check_branch
          %233 = sbr.rel (%p231) target = $region44
        $region43: #{tpu_custom_call.1} parent=35 // pred_region
          %234 = dma.done [#allocation8], 8192
        $region44: #{tpu_custom_call.1} parent=35 // pred_fallthru
          _
        // Predicated region
        $region45: #{tpu_custom_call.1} parent=35 // pred_check
          %p235 = pneg %p99
        $region46: #{tpu_custom_call.1} parent=35 // pred_check_branch
          %237 = sbr.rel (%p235) target = $region48
        $region47: #{tpu_custom_call.1} parent=35 // pred_region
          %238 = dma.done [#allocation8], 8192
        $region48: #{tpu_custom_call.1} parent=35 // pred_fallthru
          _
        %s239 = sand.u32 %s44, 1
        %s240 = scalar_lea.sflag [#allocation5], %s239
        %s241 = sand.u32 %s44, 1
        %s242 = smul.addr %s241, 8
        %s243 = scalar_lea.vmem [#allocation4], %s242
        %p244 = pneg %p57
        %p245 = pneg %p54
        %p246 = pneg %p78
        %p247 = pneg %p75
        %p248 = pneg %p99
        %p249 = pneg %p96
        %p250 = pneg %p120
        %p251 = pneg %p117
        %p252 = pneg %p148
        %p253 = pneg %p145
        %s254 = sand.u32 %s135, 1
        %s255 = scalar_lea.sflag [#allocation6], %s254
        %s256 = sand.u32 %s135, 1
        %s257 = smul.addr %s256, 8
        %s258 = scalar_lea.vmem [#allocation10], %s257
        %p259 = scmp.eq.s32.totalorder %s27, 0
        // Predicated region
        $region49: #{tpu_custom_call.1} parent=35 // pred_check
          %p260 = pneg %p259
        $region50: #{tpu_custom_call.1} parent=35 // pred_check_branch
          %262 = sbr.rel (%p260) target = $region52
        $region51: #{tpu_custom_call.1} parent=35 // pred_region
          %263 = vst [vmem:[#allocation2] sm:$0xff] 0.0
          %264 = vst [vmem:[#allocation3] sm:$0xff] 0.0
        $region52: #{tpu_custom_call.1} parent=35 // pred_fallthru
          _
        %v265 = vld [vmem:[%s226] sm:$0xff]
        %v266 = vld [vmem:[#allocation7] sm:$0xff]
        %v267 = vld [vmem:[#allocation7 + $0x8] sm:$0xff]
        %v268 = vld [vmem:[#allocation7 + $0x10] sm:$0xff]
        %v269 = vld [vmem:[#allocation7 + $0x18] sm:$0xff]
        %v270 = vld [vmem:[#allocation7 + $0x20] sm:$0xff]
        %v271 = vld [vmem:[#allocation7 + $0x28] sm:$0xff]
        %v272 = vld [vmem:[#allocation7 + $0x30] sm:$0xff]
        %v273 = vld [vmem:[#allocation7 + $0x38] sm:$0xff]
        %v274 = vld [vmem:[#allocation7 + $0x40] sm:$0xff]
        %v275 = vld [vmem:[#allocation7 + $0x48] sm:$0xff]
        %v276 = vld [vmem:[#allocation7 + $0x50] sm:$0xff]
        %v277 = vld [vmem:[#allocation7 + $0x58] sm:$0xff]
        %v278 = vld [vmem:[#allocation7 + $0x60] sm:$0xff]
        %v279 = vld [vmem:[#allocation7 + $0x68] sm:$0xff]
        %v280 = vld [vmem:[#allocation7 + $0x70] sm:$0xff]
        %v281 = vld [vmem:[#allocation7 + $0x78] sm:$0xff]
        %v282 = vld [vmem:[#allocation7 + $0x80] sm:$0xff]
        %v283 = vld [vmem:[#allocation7 + $0x88] sm:$0xff]
        %v284 = vld [vmem:[#allocation7 + $0x90] sm:$0xff]
        %v285 = vld [vmem:[#allocation7 + $0x98] sm:$0xff]
        %v286 = vld [vmem:[#allocation7 + $0xa0] sm:$0xff]
        %v287 = vld [vmem:[#allocation7 + $0xa8] sm:$0xff]
        %v288 = vld [vmem:[#allocation7 + $0xb0] sm:$0xff]
        %v289 = vld [vmem:[#allocation7 + $0xb8] sm:$0xff]
        %v290 = vld [vmem:[#allocation7 + $0xc0] sm:$0xff]
        %v291 = vld [vmem:[#allocation7 + $0xc8] sm:$0xff]
        %v292 = vld [vmem:[#allocation7 + $0xd0] sm:$0xff]
        %v293 = vld [vmem:[#allocation7 + $0xd8] sm:$0xff]
        %v294 = vld [vmem:[#allocation7 + $0xe0] sm:$0xff]
        %v295 = vld [vmem:[#allocation7 + $0xe8] sm:$0xff]
        %v296 = vld [vmem:[#allocation7 + $0xf0] sm:$0xff]
        %v297 = vld [vmem:[#allocation7 + $0xf8] sm:$0xff]
        %v298 = vld [vmem:[#allocation7 + $0x100] sm:$0xff]
        %v299 = vld [vmem:[#allocation7 + $0x108] sm:$0xff]
        %v300 = vld [vmem:[#allocation7 + $0x110] sm:$0xff]
        %v301 = vld [vmem:[#allocation7 + $0x118] sm:$0xff]
        %v302 = vld [vmem:[#allocation7 + $0x120] sm:$0xff]
        %v303 = vld [vmem:[#allocation7 + $0x128] sm:$0xff]
        %v304 = vld [vmem:[#allocation7 + $0x130] sm:$0xff]
        %v305 = vld [vmem:[#allocation7 + $0x138] sm:$0xff]
        %v306 = vld [vmem:[#allocation7 + $0x140] sm:$0xff]
        %v307 = vld [vmem:[#allocation7 + $0x148] sm:$0xff]
        %v308 = vld [vmem:[#allocation7 + $0x150] sm:$0xff]
        %v309 = vld [vmem:[#allocation7 + $0x158] sm:$0xff]
        %v310 = vld [vmem:[#allocation7 + $0x160] sm:$0xff]
        %v311 = vld [vmem:[#allocation7 + $0x168] sm:$0xff]
        %v312 = vld [vmem:[#allocation7 + $0x170] sm:$0xff]
        %v313 = vld [vmem:[#allocation7 + $0x178] sm:$0xff]
        %v314 = vld [vmem:[#allocation7 + $0x180] sm:$0xff]
        %v315 = vld [vmem:[#allocation7 + $0x188] sm:$0xff]
        %v316 = vld [vmem:[#allocation7 + $0x190] sm:$0xff]
        %v317 = vld [vmem:[#allocation7 + $0x198] sm:$0xff]
        %v318 = vld [vmem:[#allocation7 + $0x1a0] sm:$0xff]
        %v319 = vld [vmem:[#allocation7 + $0x1a8] sm:$0xff]
        %v320 = vld [vmem:[#allocation7 + $0x1b0] sm:$0xff]
        %v321 = vld [vmem:[#allocation7 + $0x1b8] sm:$0xff]
        %v322 = vld [vmem:[#allocation7 + $0x1c0] sm:$0xff]
        %v323 = vld [vmem:[#allocation7 + $0x1c8] sm:$0xff]
        %v324 = vld [vmem:[#allocation7 + $0x1d0] sm:$0xff]
        %v325 = vld [vmem:[#allocation7 + $0x1d8] sm:$0xff]
        %v326 = vld [vmem:[#allocation7 + $0x1e0] sm:$0xff]
        %v327 = vld [vmem:[#allocation7 + $0x1e8] sm:$0xff]
        %v328 = vld [vmem:[#allocation7 + $0x1f0] sm:$0xff]
        %v329 = vld [vmem:[#allocation7 + $0x1f8] sm:$0xff]
        %v330 = vld [vmem:[#allocation2] sm:$0xff]
        %v331 = vld [vmem:[#allocation9] sm:$0xff]
        %v332 = vld [vmem:[#allocation9 + $0x8] sm:$0xff]
        %v333 = vld [vmem:[#allocation9 + $0x10] sm:$0xff]
        %v334 = vld [vmem:[#allocation9 + $0x18] sm:$0xff]
        %v335 = vld [vmem:[#allocation9 + $0x20] sm:$0xff]
        %v336 = vld [vmem:[#allocation9 + $0x28] sm:$0xff]
        %v337 = vld [vmem:[#allocation9 + $0x30] sm:$0xff]
        %v338 = vld [vmem:[#allocation9 + $0x38] sm:$0xff]
        %v339 = vld [vmem:[#allocation9 + $0x40] sm:$0xff]
        %v340 = vld [vmem:[#allocation9 + $0x48] sm:$0xff]
        %v341 = vld [vmem:[#allocation9 + $0x50] sm:$0xff]
        %v342 = vld [vmem:[#allocation9 + $0x58] sm:$0xff]
        %v343 = vld [vmem:[#allocation9 + $0x60] sm:$0xff]
        %v344 = vld [vmem:[#allocation9 + $0x68] sm:$0xff]
        %v345 = vld [vmem:[#allocation9 + $0x70] sm:$0xff]
        %v346 = vld [vmem:[#allocation9 + $0x78] sm:$0xff]
        %v347 = vld [vmem:[#allocation9 + $0x80] sm:$0xff]
        %v348 = vld [vmem:[#allocation9 + $0x88] sm:$0xff]
        %v349 = vld [vmem:[#allocation9 + $0x90] sm:$0xff]
        %v350 = vld [vmem:[#allocation9 + $0x98] sm:$0xff]
        %v351 = vld [vmem:[#allocation9 + $0xa0] sm:$0xff]
        %v352 = vld [vmem:[#allocation9 + $0xa8] sm:$0xff]
        %v353 = vld [vmem:[#allocation9 + $0xb0] sm:$0xff]
        %v354 = vld [vmem:[#allocation9 + $0xb8] sm:$0xff]
        %v355 = vld [vmem:[#allocation9 + $0xc0] sm:$0xff]
        %v356 = vld [vmem:[#allocation9 + $0xc8] sm:$0xff]
        %v357 = vld [vmem:[#allocation9 + $0xd0] sm:$0xff]
        %v358 = vld [vmem:[#allocation9 + $0xd8] sm:$0xff]
        %v359 = vld [vmem:[#allocation9 + $0xe0] sm:$0xff]
        %v360 = vld [vmem:[#allocation9 + $0xe8] sm:$0xff]
        %v361 = vld [vmem:[#allocation9 + $0xf0] sm:$0xff]
        %v362 = vld [vmem:[#allocation9 + $0xf8] sm:$0xff]
        %v363 = vld [vmem:[#allocation9 + $0x100] sm:$0xff]
        %v364 = vld [vmem:[#allocation9 + $0x108] sm:$0xff]
        %v365 = vld [vmem:[#allocation9 + $0x110] sm:$0xff]
        %v366 = vld [vmem:[#allocation9 + $0x118] sm:$0xff]
        %v367 = vld [vmem:[#allocation9 + $0x120] sm:$0xff]
        %v368 = vld [vmem:[#allocation9 + $0x128] sm:$0xff]
        %v369 = vld [vmem:[#allocation9 + $0x130] sm:$0xff]
        %v370 = vld [vmem:[#allocation9 + $0x138] sm:$0xff]
        %v371 = vld [vmem:[#allocation9 + $0x140] sm:$0xff]
        %v372 = vld [vmem:[#allocation9 + $0x148] sm:$0xff]
        %v373 = vld [vmem:[#allocation9 + $0x150] sm:$0xff]
        %v374 = vld [vmem:[#allocation9 + $0x158] sm:$0xff]
        %v375 = vld [vmem:[#allocation9 + $0x160] sm:$0xff]
        %v376 = vld [vmem:[#allocation9 + $0x168] sm:$0xff]
        %v377 = vld [vmem:[#allocation9 + $0x170] sm:$0xff]
        %v378 = vld [vmem:[#allocation9 + $0x178] sm:$0xff]
        %v379 = vld [vmem:[#allocation9 + $0x180] sm:$0xff]
        %v380 = vld [vmem:[#allocation9 + $0x188] sm:$0xff]
        %v381 = vld [vmem:[#allocation9 + $0x190] sm:$0xff]
        %v382 = vld [vmem:[#allocation9 + $0x198] sm:$0xff]
        %v383 = vld [vmem:[#allocation9 + $0x1a0] sm:$0xff]
        %v384 = vld [vmem:[#allocation9 + $0x1a8] sm:$0xff]
        %v385 = vld [vmem:[#allocation9 + $0x1b0] sm:$0xff]
        %v386 = vld [vmem:[#allocation9 + $0x1b8] sm:$0xff]
        %v387 = vld [vmem:[#allocation9 + $0x1c0] sm:$0xff]
        %v388 = vld [vmem:[#allocation9 + $0x1c8] sm:$0xff]
        %v389 = vld [vmem:[#allocation9 + $0x1d0] sm:$0xff]
        %v390 = vld [vmem:[#allocation9 + $0x1d8] sm:$0xff]
        %v391 = vld [vmem:[#allocation9 + $0x1e0] sm:$0xff]
        %v392 = vld [vmem:[#allocation9 + $0x1e8] sm:$0xff]
        %v393 = vld [vmem:[#allocation9 + $0x1f0] sm:$0xff]
        %v394 = vld [vmem:[#allocation9 + $0x1f8] sm:$0xff]
        %395 = vmatprep.subr.mxu0 %v332
        %396 = vmatpush1.msra.mxu0 %v331
        %397 = vmatprep.subr.mxu0 %v336
        %398 = vmatpush1.msra.mxu0 %v335
        %399 = vmatprep.subr.mxu0 %v340
        %400 = vmatpush1.msra.mxu0 %v339
        %401 = vmatprep.subr.mxu0 %v344
        %402 = vmatpush1.msra.mxu0 %v343
        %403 = vmatprep.subr.mxu0 %v348
        %404 = vmatpush1.msra.mxu0 %v347
        %405 = vmatprep.subr.mxu0 %v352
        %406 = vmatpush1.msra.mxu0 %v351
        %407 = vmatprep.subr.mxu0 %v356
        %408 = vmatpush1.msra.mxu0 %v355
        %409 = vmatprep.subr.mxu0 %v360
        %410 = vmatpush1.msra.mxu0 %v359
        %411 = vmatprep.subr.mxu0 %v364
        %412 = vmatpush1.msra.mxu0 %v363
        %413 = vmatprep.subr.mxu0 %v368
        %414 = vmatpush1.msra.mxu0 %v367
        %415 = vmatprep.subr.mxu0 %v372
        %416 = vmatpush1.msra.mxu0 %v371
        %417 = vmatprep.subr.mxu0 %v376
        %418 = vmatpush1.msra.mxu0 %v375
        %419 = vmatprep.subr.mxu0 %v380
        %420 = vmatpush1.msra.mxu0 %v379
        %421 = vmatprep.subr.mxu0 %v384
        %422 = vmatpush1.msra.mxu0 %v383
        %423 = vmatprep.subr.mxu0 %v388
        %424 = vmatpush1.msra.mxu0 %v387
        %425 = vmatprep.subr.mxu0 %v392
        %426 = vmatpush1.msra.mxu0 %v391
        %427 = vmatprep.subr.mxu0 0.0
        %428 = vmatpush1.msra.mxu0 0.0
        %429 = vmatprep.subr.mxu0 0.0
        %430 = vmatpush1.msra.mxu0 0.0
        %431 = vmatprep.subr.mxu0 0.0
        %432 = vmatpush1.msra.mxu0 0.0
        %433 = vmatprep.subr.mxu0 0.0
        %434 = vmatpush1.msra.mxu0 0.0
        %435 = vmatprep.subr.mxu0 0.0
        %436 = vmatpush1.msra.mxu0 0.0
        %437 = vmatprep.subr.mxu0 0.0
        %438 = vmatpush1.msra.mxu0 0.0
        %439 = vmatprep.subr.mxu0 0.0
        %440 = vmatpush1.msra.mxu0 0.0
        %441 = vmatprep.subr.mxu0 0.0
        %442 = vmatpush1.msra.mxu0 0.0
        %443 = vmatprep.subr.mxu0 0.0
        %444 = vmatpush1.msra.mxu0 0.0
        %445 = vmatprep.subr.mxu0 0.0
        %446 = vmatpush1.msra.mxu0 0.0
        %447 = vmatprep.subr.mxu0 0.0
        %448 = vmatpush1.msra.mxu0 0.0
        %449 = vmatprep.subr.mxu0 0.0
        %450 = vmatpush1.msra.mxu0 0.0
        %451 = vmatprep.subr.mxu0 0.0
        %452 = vmatpush1.msra.mxu0 0.0
        %453 = vmatprep.subr.mxu0 0.0
        %454 = vmatpush1.msra.mxu0 0.0
        %455 = vmatprep.subr.mxu0 0.0
        %456 = vmatpush1.msra.mxu0 0.0
        %457 = vmatprep.subr.mxu0 0.0
        %458 = vmatpush1.msra.mxu0 0.0
        %459 = vmatprep.mubr.f32.mxu0 0.0
        %460 = vmatmul.mubr.f32.gmra.mrb[0].mxu0 %v330
        %v461 = vpop.f32.mrb[0].mxu0
        %v462 = vadd.f32 0.0, %v461
        %v463 = vpop.f32.mrb[0].mxu0
        %v464 = vadd.f32 0.0, %v463
        %465 = vdwg.mxu0
        %466 = vmatprep.subr.mxu0 %v334
        %467 = vmatpush1.msra.mxu0 %v333
        %468 = vmatprep.subr.mxu0 %v338
        %469 = vmatpush1.msra.mxu0 %v337
        %470 = vmatprep.subr.mxu0 %v342
        %471 = vmatpush1.msra.mxu0 %v341
        %472 = vmatprep.subr.mxu0 %v346
        %473 = vmatpush1.msra.mxu0 %v345
        %474 = vmatprep.subr.mxu0 %v350
        %475 = vmatpush1.msra.mxu0 %v349
        %476 = vmatprep.subr.mxu0 %v354
        %477 = vmatpush1.msra.mxu0 %v353
        %478 = vmatprep.subr.mxu0 %v358
        %479 = vmatpush1.msra.mxu0 %v357
        %480 = vmatprep.subr.mxu0 %v362
        %481 = vmatpush1.msra.mxu0 %v361
        %482 = vmatprep.subr.mxu0 %v366
        %483 = vmatpush1.msra.mxu0 %v365
        %484 = vmatprep.subr.mxu0 %v370
        %485 = vmatpush1.msra.mxu0 %v369
        %486 = vmatprep.subr.mxu0 %v374
        %487 = vmatpush1.msra.mxu0 %v373
        %488 = vmatprep.subr.mxu0 %v378
        %489 = vmatpush1.msra.mxu0 %v377
        %490 = vmatprep.subr.mxu0 %v382
        %491 = vmatpush1.msra.mxu0 %v381
        %492 = vmatprep.subr.mxu0 %v386
        %493 = vmatpush1.msra.mxu0 %v385
        %494 = vmatprep.subr.mxu0 %v390
        %495 = vmatpush1.msra.mxu0 %v389
        %496 = vmatprep.subr.mxu0 %v394
        %497 = vmatpush1.msra.mxu0 %v393
        %498 = vmatprep.subr.mxu0 0.0
        %499 = vmatpush1.msra.mxu0 0.0
        %500 = vmatprep.subr.mxu0 0.0
        %501 = vmatpush1.msra.mxu0 0.0
        %502 = vmatprep.subr.mxu0 0.0
        %503 = vmatpush1.msra.mxu0 0.0
        %504 = vmatprep.subr.mxu0 0.0
        %505 = vmatpush1.msra.mxu0 0.0
        %506 = vmatprep.subr.mxu0 0.0
        %507 = vmatpush1.msra.mxu0 0.0
        %508 = vmatprep.subr.mxu0 0.0
        %509 = vmatpush1.msra.mxu0 0.0
        %510 = vmatprep.subr.mxu0 0.0
        %511 = vmatpush1.msra.mxu0 0.0
        %512 = vmatprep.subr.mxu0 0.0
        %513 = vmatpush1.msra.mxu0 0.0
        %514 = vmatprep.subr.mxu0 0.0
        %515 = vmatpush1.msra.mxu0 0.0
        %516 = vmatprep.subr.mxu0 0.0
        %517 = vmatpush1.msra.mxu0 0.0
        %518 = vmatprep.subr.mxu0 0.0
        %519 = vmatpush1.msra.mxu0 0.0
        %520 = vmatprep.subr.mxu0 0.0
        %521 = vmatpush1.msra.mxu0 0.0
        %522 = vmatprep.subr.mxu0 0.0
        %523 = vmatpush1.msra.mxu0 0.0
        %524 = vmatprep.subr.mxu0 0.0
        %525 = vmatpush1.msra.mxu0 0.0
        %526 = vmatprep.subr.mxu0 0.0
        %527 = vmatpush1.msra.mxu0 0.0
        %528 = vmatprep.subr.mxu0 0.0
        %529 = vmatpush1.msra.mxu0 0.0
        %530 = vmatprep.mubr.f32.mxu0 0.0
        %531 = vmatmul.mubr.f32.gmra.mrb[0].mxu0 %v330
        %v532 = vpop.f32.mrb[0].mxu0
        %v533 = vadd.f32 0.0, %v532
        %v534 = vpop.f32.mrb[0].mxu0
        %v535 = vadd.f32 0.0, %v534
        %536 = vdwg.mxu0
        %537 = vmatprep.subr.mxu0 %v267
        %538 = vmatpush1.msra.mxu0 %v266
        %539 = vmatprep.subr.mxu0 %v271
        %540 = vmatpush1.msra.mxu0 %v270
        %541 = vmatprep.subr.mxu0 %v275
        %542 = vmatpush1.msra.mxu0 %v274
        %543 = vmatprep.subr.mxu0 %v279
        %544 = vmatpush1.msra.mxu0 %v278
        %545 = vmatprep.subr.mxu0 %v283
        %546 = vmatpush1.msra.mxu0 %v282
        %547 = vmatprep.subr.mxu0 %v287
        %548 = vmatpush1.msra.mxu0 %v286
        %549 = vmatprep.subr.mxu0 %v291
        %550 = vmatpush1.msra.mxu0 %v290
        %551 = vmatprep.subr.mxu0 %v295
        %552 = vmatpush1.msra.mxu0 %v294
        %553 = vmatprep.subr.mxu0 %v299
        %554 = vmatpush1.msra.mxu0 %v298
        %555 = vmatprep.subr.mxu0 %v303
        %556 = vmatpush1.msra.mxu0 %v302
        %557 = vmatprep.subr.mxu0 %v307
        %558 = vmatpush1.msra.mxu0 %v306
        %559 = vmatprep.subr.mxu0 %v311
        %560 = vmatpush1.msra.mxu0 %v310
        %561 = vmatprep.subr.mxu0 %v315
        %562 = vmatpush1.msra.mxu0 %v314
        %563 = vmatprep.subr.mxu0 %v319
        %564 = vmatpush1.msra.mxu0 %v318
        %565 = vmatprep.subr.mxu0 %v323
        %566 = vmatpush1.msra.mxu0 %v322
        %567 = vmatprep.subr.mxu0 %v327
        %568 = vmatpush1.msra.mxu0 %v326
        %569 = vmatprep.subr.mxu0 0.0
        %570 = vmatpush1.msra.mxu0 0.0
        %571 = vmatprep.subr.mxu0 0.0
        %572 = vmatpush1.msra.mxu0 0.0
        %573 = vmatprep.subr.mxu0 0.0
        %574 = vmatpush1.msra.mxu0 0.0
        %575 = vmatprep.subr.mxu0 0.0
        %576 = vmatpush1.msra.mxu0 0.0
        %577 = vmatprep.subr.mxu0 0.0
        %578 = vmatpush1.msra.mxu0 0.0
        %579 = vmatprep.subr.mxu0 0.0
        %580 = vmatpush1.msra.mxu0 0.0
        %581 = vmatprep.subr.mxu0 0.0
        %582 = vmatpush1.msra.mxu0 0.0
        %583 = vmatprep.subr.mxu0 0.0
        %584 = vmatpush1.msra.mxu0 0.0
        %585 = vmatprep.subr.mxu0 0.0
        %586 = vmatpush1.msra.mxu0 0.0
        %587 = vmatprep.subr.mxu0 0.0
        %588 = vmatpush1.msra.mxu0 0.0
        %589 = vmatprep.subr.mxu0 0.0
        %590 = vmatpush1.msra.mxu0 0.0
        %591 = vmatprep.subr.mxu0 0.0
        %592 = vmatpush1.msra.mxu0 0.0
        %593 = vmatprep.subr.mxu0 0.0
        %594 = vmatpush1.msra.mxu0 0.0
        %595 = vmatprep.subr.mxu0 0.0
        %596 = vmatpush1.msra.mxu0 0.0
        %597 = vmatprep.subr.mxu0 0.0
        %598 = vmatpush1.msra.mxu0 0.0
        %599 = vmatprep.subr.mxu0 0.0
        %600 = vmatpush1.msra.mxu0 0.0
        %601 = vmatprep.mubr.f32.mxu0 0.0
        %602 = vmatmul.mubr.f32.gmra.mrb[0].mxu0 %v265
        %v603 = vpop.f32.mrb[0].mxu0
        %v604 = vadd.f32 %v462, %v603
        %v605 = vpop.f32.mrb[0].mxu0
        %v606 = vadd.f32 %v464, %v605
        %607 = vdwg.mxu0
        %608 = vmatprep.subr.mxu0 %v269
        %609 = vmatpush1.msra.mxu0 %v268
        %610 = vmatprep.subr.mxu0 %v273
        %611 = vmatpush1.msra.mxu0 %v272
        %612 = vmatprep.subr.mxu0 %v277
        %613 = vmatpush1.msra.mxu0 %v276
        %614 = vmatprep.subr.mxu0 %v281
        %615 = vmatpush1.msra.mxu0 %v280
        %616 = vmatprep.subr.mxu0 %v285
        %617 = vmatpush1.msra.mxu0 %v284
        %618 = vmatprep.subr.mxu0 %v289
        %619 = vmatpush1.msra.mxu0 %v288
        %620 = vmatprep.subr.mxu0 %v293
        %621 = vmatpush1.msra.mxu0 %v292
        %622 = vmatprep.subr.mxu0 %v297
        %623 = vmatpush1.msra.mxu0 %v296
        %624 = vmatprep.subr.mxu0 %v301
        %625 = vmatpush1.msra.mxu0 %v300
        %626 = vmatprep.subr.mxu0 %v305
        %627 = vmatpush1.msra.mxu0 %v304
        %628 = vmatprep.subr.mxu0 %v309
        %629 = vmatpush1.msra.mxu0 %v308
        %630 = vmatprep.subr.mxu0 %v313
        %631 = vmatpush1.msra.mxu0 %v312
        %632 = vmatprep.subr.mxu0 %v317
        %633 = vmatpush1.msra.mxu0 %v316
        %634 = vmatprep.subr.mxu0 %v321
        %635 = vmatpush1.msra.mxu0 %v320
        %636 = vmatprep.subr.mxu0 %v325
        %637 = vmatpush1.msra.mxu0 %v324
        %638 = vmatprep.subr.mxu0 %v329
        %639 = vmatpush1.msra.mxu0 %v328
        %640 = vmatprep.subr.mxu0 0.0
        %641 = vmatpush1.msra.mxu0 0.0
        %642 = vmatprep.subr.mxu0 0.0
        %643 = vmatpush1.msra.mxu0 0.0
        %644 = vmatprep.subr.mxu0 0.0
        %645 = vmatpush1.msra.mxu0 0.0
        %646 = vmatprep.subr.mxu0 0.0
        %647 = vmatpush1.msra.mxu0 0.0
        %648 = vmatprep.subr.mxu0 0.0
        %649 = vmatpush1.msra.mxu0 0.0
        %650 = vmatprep.subr.mxu0 0.0
        %651 = vmatpush1.msra.mxu0 0.0
        %652 = vmatprep.subr.mxu0 0.0
        %653 = vmatpush1.msra.mxu0 0.0
        %654 = vmatprep.subr.mxu0 0.0
        %655 = vmatpush1.msra.mxu0 0.0
        %656 = vmatprep.subr.mxu0 0.0
        %657 = vmatpush1.msra.mxu0 0.0
        %658 = vmatprep.subr.mxu0 0.0
        %659 = vmatpush1.msra.mxu0 0.0
        %660 = vmatprep.subr.mxu0 0.0
        %661 = vmatpush1.msra.mxu0 0.0
        %662 = vmatprep.subr.mxu0 0.0
        %663 = vmatpush1.msra.mxu0 0.0
        %664 = vmatprep.subr.mxu0 0.0
        %665 = vmatpush1.msra.mxu0 0.0
        %666 = vmatprep.subr.mxu0 0.0
        %667 = vmatpush1.msra.mxu0 0.0
        %668 = vmatprep.subr.mxu0 0.0
        %669 = vmatpush1.msra.mxu0 0.0
        %670 = vmatprep.subr.mxu0 0.0
        %671 = vmatpush1.msra.mxu0 0.0
        %672 = vmatprep.mubr.f32.mxu0 0.0
        %673 = vmatmul.mubr.f32.gmra.mrb[0].mxu0 %v265
        %v674 = vpop.f32.mrb[0].mxu0
        %v675 = vadd.f32 %v533, %v674
        %v676 = vpop.f32.mrb[0].mxu0
        %v677 = vadd.f32 %v535, %v676
        %678 = vdwg.mxu0
        %v679 = vld [vmem:[%s3] sm:$0xf]
        %v681 = vlaneseq
        %v682 = vshrl.u32 %v681, 7
        %v683 = vsub.s32 0, %v682
        %v684 = vrot.slane %v679, %v683
        %v685 = vlaneseq
        %v686 = vshrl.u32 %v685, 7
        %v687 = vsub.s32 1, %v686
        %v688 = vrot.slane %v679, %v687
        %v689 = vlaneseq
        %v690 = vshrl.u32 %v689, 7
        %v691 = vsub.s32 2, %v690
        %v692 = vrot.slane %v679, %v691
        %v693 = vlaneseq
        %v694 = vshrl.u32 %v693, 7
        %v695 = vsub.s32 3, %v694
        %v696 = vrot.slane %v679, %v695
        %v701 = vadd.f32 %v604, %v684
        %v702 = vadd.f32 %v606, %v688
        %v703 = vadd.f32 %v675, %v692
        %v704 = vadd.f32 %v677, %v696
        %v705 = vxor.u32 %v701, 2147483648
        %v706 = vmul.f32 %v705, 1.442695
        %v707 = vpow.pop %v706
        %v708 = vadd.f32 %v707, 1.0
        %v709 = vrcp.pop %v708
        %v710 = vmul.f32 1.0, %v709
        %v711 = vxor.u32 %v702, 2147483648
        %v712 = vmul.f32 %v711, 1.442695
        %v713 = vpow.pop %v712
        %v714 = vadd.f32 %v713, 1.0
        %v715 = vrcp.pop %v714
        %v716 = vmul.f32 1.0, %v715
        %v717 = vtanh.pop %v703
        %v718 = vxor.u32 %v704, 2147483648
        %v719 = vmul.f32 %v718, 1.442695
        %v720 = vpow.pop %v719
        %v721 = vadd.f32 %v720, 1.0
        %v722 = vrcp.pop %v721
        %v723 = vmul.f32 1.0, %v722
        %v724 = vld [vmem:[#allocation3] sm:$0xff]
        %v725 = vmul.f32 %v716, %v724
        %v726 = vmul.f32 %v710, %v717
        %v727 = vadd.f32 %v725, %v726
        %v728 = vtanh.pop %v727
        %v729 = vmul.f32 %v723, %v728
        %730 = vst [vmem:[#allocation3] sm:$0xff] %v727
        %731 = vst [vmem:[#allocation2] sm:$0xff] %v729
        %732 = vst [vmem:[%s258] sm:$0xff] %v729
        %s733 = sand.u32 %s135, 1
        %s734 = scalar_lea.sflag [#allocation6], %s733
        %s735 = sand.u32 %s135, 1
        %s736 = smul.addr %s735, 8
        %s737 = scalar_lea.vmem [#allocation10], %s736
        // Predicated region
        $region53: #{tpu_custom_call.1} parent=35 // pred_check
          %p738 = pneg %p145
        $region54: #{tpu_custom_call.1} parent=35 // pred_check_branch
          %740 = sbr.rel (%p738) target = $region56
        $region55: #{tpu_custom_call.1} parent=35 // pred_region
          %s742 = ssub.s32 128, 128
          %743 = vsyncadd %s734, %s742
          %s744 = sadd.s32 %s26, %s27
          %s745 = smul.addr %s744, 128
          %s746 = scalar_lea.hbm %s4, %s745
          %s748 = sshll.u32 %s737, 4
          %s749 = int_to_ptr.vmem [resolvable:$true] %s748
          %751 = dma.vmem_to_hbm [thread:$0]  %s749, 128, %s746, %s734
        $region56: #{tpu_custom_call.1} parent=35 // pred_fallthru
          _
      $region36: #{tpu_custom_call.1} parent=5 // pred_fallthru
        _
      %p752 = scmp.le.s32.totalorder 2, %s17
      // Predicated region
      $region57: #{tpu_custom_call.1} parent=5 // pred_check
        %p753 = pneg %p752
      $region58: #{tpu_custom_call.1} parent=5 // pred_check_branch
        %755 = sbr.rel (%p753) target = $region60
      $region59: #{tpu_custom_call.1} parent=5 // pred_region
        %s756 = ssub.s32 %s17, 2
        // Predicated region
        $region61: #{tpu_custom_call.1} parent=59 // pred_check
          %p757 = pneg %p151
        $region62: #{tpu_custom_call.1} parent=59 // pred_check_branch
          %759 = sbr.rel (%p757) target = $region64
        $region63: #{tpu_custom_call.1} parent=59 // pred_region
          %s760 = sand.u32 %s136, 1
          %s761 = scalar_lea.sflag [#allocation6], %s760
          %s762 = sand.u32 %s136, 1
          %s763 = smul.addr %s762, 8
          %s764 = scalar_lea.vmem [#allocation10], %s763
          %765 = dma.done %s761, 128
        $region64: #{tpu_custom_call.1} parent=59 // pred_fallthru
          _
      $region60: #{tpu_custom_call.1} parent=5 // pred_fallthru
        _
    $region6: #{tpu_custom_call.1} parent=1 // loop_footer
      %s21 = sadd.s32 1, %s17
    $region7: #{tpu_custom_call.1} parent=1 // loop_footer_branch
      %16 = sbr.rel target = $region3
    $region8: #{tpu_custom_call.1} parent=1 // loop_exit
      _
    %766 = vsyncpa [#allocation5], 1
    %s767 = scalar_lea.sflag [#allocation5], 1
    %768 = vsyncpa %s767, 1
    %769 = vsyncpa [#allocation8], 1
    %770 = vsyncpa [#allocation6], 1
    %s771 = scalar_lea.sflag [#allocation6], 1
    %772 = vsyncpa %s771, 1

</llo_original>
